<compile_context>
chip_gen: v6e
topology: v6e:2x2x1
jax: 0.10.0
libtpu: 0.0.40
codegen_flags: <defaults>
</compile_context>

<pallas_src>
import functools

import jax
import jax.numpy as jnp
from jax.experimental import pallas as pl
from jax.experimental.pallas import tpu as pltpu

_NEG_BIG = -1e30
_POS_BIG = 1e30


def _round_up(n, m):
    return ((n + m - 1) // m) * m


def _vqprompt_kernel(x_ref, nk_ref, g_ref, pk2_ref, p_ref,
                     quant_ref, loss_ref, *,
                     soft_t, loss_scale, pool, batch, tile_b):
    i = pl.program_id(0)

    x = x_ref[...].astype(jnp.float32)        # (TB, key_d)
    n_K = nk_ref[...]                         # (pool_pad, key_d) f32, pre-normalized
    G = g_ref[...]                            # (pool_pad, pool_pad) f32 Gram of p
    pk2 = pk2_ref[...]                        # (1, pool_pad) f32 == ||p_k||^2

    # --- cos_sim = einsum('bd,kd->bk', x, n_K) on the MXU ---
    contract_last = (((1,), (1,)), ((), ()))
    cos = jax.lax.dot_general(x, n_K, contract_last,
                              preferred_element_type=jnp.float32)   # (TB, pool_pad)

    col = jax.lax.broadcasted_iota(jnp.int32, cos.shape, 1)          # (TB, pool_pad)
    col_valid = col < pool

    # --- alpha = softmax(cos / soft_t) over the real pool entries (f32) ---
    logits = jnp.where(col_valid, cos * (1.0 / soft_t), _NEG_BIG)
    m = jnp.max(logits, axis=1, keepdims=True)
    e = jnp.exp(logits - m)                                          # padded -> 0
    alpha = e / jnp.sum(e, axis=1, keepdims=True)                    # exact reciprocal

    # --- distances via the Gram matrix (p_a never materialized) ---
    # cross[b,k] = p_a[b].p[k] = (alpha @ G)[b,k];  ||p_a[b]||^2 = sum_k alpha*cross
    cross = jnp.dot(alpha, G, preferred_element_type=jnp.float32)    # (TB, pool_pad)
    pa_sq = jnp.sum(alpha * cross, axis=1, keepdims=True)            # (TB, 1)

    score = pk2 - 2.0 * cross                     # dist minus per-row ||p_a||^2
    score = jnp.where(col_valid, score, _POS_BIG)

    # --- idxmin = dist.min(1).indices (first-min tie-break, like torch.min) ---
    smin = jnp.min(score, axis=1, keepdims=True)                     # (TB, 1)
    cand = jnp.where(score <= smin, col, score.shape[1])
    idx = jnp.min(cand, axis=1, keepdims=True)                       # (TB, 1)

    # --- quantized = p.index_select(0, idxmin): bf16 one-hot MXU gather ---
    onehot = (col == idx).astype(p_ref.dtype)                        # exact in bf16
    quant = jnp.dot(onehot, p_ref[...], preferred_element_type=jnp.float32)
    # P_ = p_a + (quantized - p_a).detach() == quantized in the forward pass.
    quant_ref[...] = quant.astype(quant_ref.dtype)

    # --- per-tile partial VQ loss: (vq+commit) * sum_b ||p_a[b]-p[idx_b]||^2 ---
    dmin = jnp.maximum(smin + pa_sq, 0.0)                            # true sq. dist
    row = jax.lax.broadcasted_iota(jnp.int32, dmin.shape, 0) + i * tile_b
    dmin = jnp.where(row < batch, dmin, 0.0)                         # drop pad rows
    loss_ref[...] = (jnp.sum(dmin) * loss_scale).reshape(1, 1, 1).astype(
        loss_ref.dtype)


def vqprompt_pallas(x_querry, K, p, soft_t, vq_coef=0.4, comit_coef=0.1,
                    tile_b=256, out_dtype=jnp.bfloat16):
    """VQPrompt hot path in one Pallas kernel.

    x_querry: (B, key_d) f32, K: (pool, key_d) f32, p: (pool, L, emb_d) f32.
    Returns ([Ek, Ev], loss) with Ek/Ev of shape (B, L//2, emb_d) (out_dtype).
    """
    x_querry = jnp.asarray(x_querry, jnp.float32)
    K = jnp.asarray(K, jnp.float32)
    p = jnp.asarray(p, jnp.float32)

    B, key_d = x_querry.shape
    pool, L, D = p.shape
    LD = L * D
    p_flat = p.reshape(pool, LD)

    # Lane-dense pool axis (softmax / argmin / one-hot run on full vregs).
    pool_pad = _round_up(max(pool, 128), 128)
    p_pad = jnp.pad(p_flat, ((0, pool_pad - pool), (0, 0)))

    # Per-call precompute hoisted out of the grid loop (perf review):
    #   normalized keys, Gram matrix G = p p^T (f32), ||p_k||^2, bf16 gather copy.
    K_pad = jnp.pad(K, ((0, pool_pad - pool), (0, 0)))
    k_norm = jnp.sqrt(jnp.sum(K_pad * K_pad, axis=1, keepdims=True))
    nK_pad = K_pad / jnp.maximum(k_norm, 1e-12)          # F.normalize(K, dim=1)
    G = jnp.dot(p_pad, p_pad.T, preferred_element_type=jnp.float32)
    pk2 = jnp.sum(p_pad * p_pad, axis=1)[None, :]        # (1, pool_pad)
    p_bf16 = p_pad.astype(jnp.bfloat16)                  # only feeds the gather

    # Batch tiling: multiple of 8 sublanes; tile_b=256 amortizes the ~0.35us
    # per-step overhead (sweep 128..512 on v6e/v5e; keep <=256 on v7x).
    tb = min(int(tile_b), _round_up(B, 8))
    tb = max(8, _round_up(tb, 8))
    B_pad = _round_up(B, tb)
    x_pad = jnp.pad(x_querry, ((0, B_pad - B), (0, 0))) if B_pad != B else x_querry
    nb = B_pad // tb

    loss_scale = float(vq_coef + comit_coef) / float(B * LD)
    kernel = functools.partial(
        _vqprompt_kernel, soft_t=float(soft_t), loss_scale=loss_scale,
        pool=int(pool), batch=int(B), tile_b=int(tb))

    # Explicit VMEM budget: residents + double-buffered x / quant tiles +
    # large in-kernel intermediates, with 2x margin; clamp to [32, 64] MiB so
    # it stays within v7x physical VMEM while lifting v5e's 16 MiB default.
    out_bytes = jnp.dtype(out_dtype).itemsize
    resident = (pool_pad * key_d * 4 + pool_pad * pool_pad * 4
                + 8 * pool_pad * 4 + pool_pad * LD * 2)
    streamed = 2 * tb * key_d * 4 + 2 * tb * LD * out_bytes + 2 * 8 * 128 * 4
    interm = tb * LD * 4 + 8 * tb * pool_pad * 4
    est = 2 * resident + streamed + interm
    vmem_limit = int(min(max(2 * est, 32 * 2 ** 20), 64 * 2 ** 20))

    def _run(single_buffer_residents):
        # Constant-index_map residents never get re-DMA'd; single-buffer them.
        extra = ({"pipeline_mode": pl.Buffered(1)}
                 if single_buffer_residents else {})
        return pl.pallas_call(
            kernel,
            grid=(nb,),
            in_specs=[
                pl.BlockSpec((tb, key_d), lambda i: (i, 0)),               # x (streamed)
                pl.BlockSpec((pool_pad, key_d), lambda i: (0, 0), **extra),   # n_K
                pl.BlockSpec((pool_pad, pool_pad), lambda i: (0, 0), **extra),  # G
                pl.BlockSpec((1, pool_pad), lambda i: (0, 0), **extra),    # ||p_k||^2
                pl.BlockSpec((pool_pad, LD), lambda i: (0, 0), **extra),   # p (bf16)
            ],
            out_specs=(
                pl.BlockSpec((tb, LD), lambda i: (i, 0)),                  # quantized
                pl.BlockSpec((1, 1, 1), lambda i: (i, 0, 0)),              # loss partial
            ),
            out_shape=(
                jax.ShapeDtypeStruct((B_pad, LD), out_dtype),
                jax.ShapeDtypeStruct((nb, 1, 1), jnp.float32),
            ),
            compiler_params=pltpu.CompilerParams(
                # Every grid step writes distinct output blocks -> batch axis
                # is "parallel" (sharded across both TCs on v7x).
                dimension_semantics=("parallel",),
                vmem_limit_bytes=vmem_limit),
        )(x_pad, nK_pad, G, pk2, p_bf16)

    try:
        quant_flat, loss_parts = _run(True)
    except Exception:
        # Fallback for JAX builds without BlockSpec(pipeline_mode=...).
        quant_flat, loss_parts = _run(False)

    loss = jnp.sum(loss_parts)
    P_ = quant_flat[:B].reshape(B, L, D)
    half = L // 2
    Ek = P_[:, :half, :]
    Ev = P_[:, half:, :]
    return [Ek, Ev], loss


class VQPromptJax:
    """JAX/Pallas port of models/zoo.py::VQPrompt (forward only)."""

    def __init__(self, emb_d, n_tasks, prompt_param, key_dim=32, seed=0):
        self.task_count = 0
        self.emb_d = emb_d
        self.key_d = key_dim
        self.n_tasks = n_tasks
        self.soft_t = prompt_param[-1]
        self.e_pool_size = int(prompt_param[0])
        self.e_p_length = int(prompt_param[1])
        self.e_layers = [0, 1, 2, 3, 4]
        self.vq_coef = 0.4
        self.comit_coef = 0.1

        # tensor_prompt(...) uses nn.init.uniform_ -> U(0, 1), deterministic here.
        key = jax.random.PRNGKey(seed)
        self.e_p = {}
        self.e_k = {}
        for e in self.e_layers:
            key, k1, k2 = jax.random.split(key, 3)
            self.e_p[e] = jax.random.uniform(
                k1, (self.e_pool_size, self.e_p_length, emb_d), jnp.float32)
            self.e_k[e] = jax.random.uniform(
                k2, (self.e_pool_size, self.key_d), jnp.float32)

    def process_task_count(self):
        self.task_count += 1

    def forward(self, x_querry, l, x_block, train=False, task_id=None):
        if l in self.e_layers:
            p_return, loss = vqprompt_pallas(
                x_querry, self.e_k[l], self.e_p[l],
                self.soft_t, self.vq_coef, self.comit_coef)
        else:
            p_return, loss = None, 0.0
        return p_return, loss, x_block


def _reference_forward(x, K, p, soft_t, vq_coef, comit_coef):
    """Pure-JAX forward matching the PyTorch module (for correctness check)."""
    nK = K / jnp.maximum(
        jnp.sqrt(jnp.sum(K * K, axis=1, keepdims=True)), 1e-12)
    cos = x @ nK.T
    alpha = jax.nn.softmax(cos / soft_t, axis=1)
    pool, L, D = p.shape
    p_flat = p.reshape(pool, L * D)
    p_a = alpha @ p_flat
    dist = jnp.sum((p_a[:, None, :] - p_flat[None, :, :]) ** 2, axis=-1)
    idx = jnp.argmin(dist, axis=1)
    quant = p_flat[idx]
    mse = jnp.mean((p_a - quant) ** 2)
    loss = (vq_coef + comit_coef) * mse
    P_ = quant.reshape(x.shape[0], L, D)
    half = L // 2
    return P_[:, :half, :], P_[:, half:, :], loss


if __name__ == "__main__":
    # Small shapes consistent with the module's forward.
    B = 8
    key_d = 32
    emb_d = 32
    pool_size = 16
    p_length = 8          # Ek/Ev each get p_length // 2 = 4
    soft_t = 0.5
    prompt_param = [pool_size, p_length, soft_t]

    model = VQPromptJax(emb_d, n_tasks=5, prompt_param=prompt_param,
                        key_dim=key_d, seed=0)

    key = jax.random.PRNGKey(0)
    kx, kb = jax.random.split(key)
    x_querry = jax.random.normal(kx, (B, key_d), jnp.float32)
    x_block = jax.random.normal(kb, (B, 4, emb_d), jnp.float32)

    p_return, loss, xb = model.forward(x_querry, l=0, x_block=x_block, train=True)
    Ek, Ev = p_return
    jax.block_until_ready((Ek, Ev, loss, xb))

    assert Ek.shape == (B, p_length // 2, emb_d)
    assert Ev.shape == (B, p_length // 2, emb_d)
    assert xb.shape == x_block.shape
    assert bool(jnp.all(jnp.isfinite(Ek.astype(jnp.float32))))
    assert bool(jnp.all(jnp.isfinite(Ev.astype(jnp.float32))))
    assert bool(jnp.isfinite(loss)) and float(loss) >= 0.0

    # Correctness check against a pure-JAX reference (bf16 output tolerance).
    Ek_ref, Ev_ref, loss_ref = _reference_forward(
        x_querry, model.e_k[0], model.e_p[0], soft_t,
        model.vq_coef, model.comit_coef)
    assert bool(jnp.allclose(Ek.astype(jnp.float32), Ek_ref, rtol=2e-2, atol=1e-2))
    assert bool(jnp.allclose(Ev.astype(jnp.float32), Ev_ref, rtol=2e-2, atol=1e-2))
    assert bool(jnp.allclose(loss, loss_ref, rtol=2e-3, atol=1e-5))

    print("KERNEL_OK")
</pallas_src>

<mosaic_0001>
module attributes {stable_mosaic.version = 11 : i64} {
  func.func @_vqprompt_kernel(%arg0: i32, %arg1: memref<8x32xf32, #tpu.memory_space<vmem>>, %arg2: memref<128x32xf32, #tpu.memory_space<vmem>>, %arg3: memref<128x128xf32, #tpu.memory_space<vmem>>, %arg4: memref<1x128xf32, #tpu.memory_space<vmem>>, %arg5: memref<128x256xbf16, #tpu.memory_space<vmem>>, %arg6: memref<8x256xbf16, #tpu.memory_space<vmem>>, %arg7: memref<1x1x1xf32, #tpu.memory_space<vmem>>) attributes {dimension_semantics = [#tpu.dimension_semantics<parallel>], iteration_bounds = array<i64: 1>, scalar_prefetch = 0 : i64, scratch_operands = 0 : i64, tpu.core_type = #tpu.core_type<tc>, window_params = [{transform_indices = @transform_0, window_bounds = array<i64: 8, 32>}, {pipeline_mode = #tpu.pipeline_mode<synchronous>, transform_indices = @transform_1, window_bounds = array<i64: 128, 32>}, {pipeline_mode = #tpu.pipeline_mode<synchronous>, transform_indices = @transform_2, window_bounds = array<i64: 128, 128>}, {pipeline_mode = #tpu.pipeline_mode<synchronous>, transform_indices = @transform_3, window_bounds = array<i64: 1, 128>}, {pipeline_mode = #tpu.pipeline_mode<synchronous>, transform_indices = @transform_4, window_bounds = array<i64: 128, 256>}, {transform_indices = @transform_5, window_bounds = array<i64: 8, 256>}, {transform_indices = @transform_6, window_bounds = array<i64: 1, 1, 1>}]} {
    %c0 = arith.constant 0 : index
    %c0_0 = arith.constant 0 : index
    %0 = vector.load %arg1[%c0, %c0_0] : memref<8x32xf32, #tpu.memory_space<vmem>>, vector<8x32xf32>
    %c0_1 = arith.constant 0 : index
    %c0_2 = arith.constant 0 : index
    %1 = vector.load %arg2[%c0_1, %c0_2] : memref<128x32xf32, #tpu.memory_space<vmem>>, vector<128x32xf32>
    %c0_3 = arith.constant 0 : index
    %c0_4 = arith.constant 0 : index
    %2 = vector.load %arg3[%c0_3, %c0_4] : memref<128x128xf32, #tpu.memory_space<vmem>>, vector<128x128xf32>
    %c0_5 = arith.constant 0 : index
    %c0_6 = arith.constant 0 : index
    %3 = vector.load %arg4[%c0_5, %c0_6] : memref<1x128xf32, #tpu.memory_space<vmem>>, vector<1x128xf32>
    %cst = arith.constant dense<0.000000e+00> : vector<8x128xf32>
    %4 = tpu.matmul %0, %1, %cst {dimension_numbers = #tpu.dot_dimension_numbers<[1], [1], [0], [0], [0, 0, 1, 0], [], []>} : vector<8x32xf32>, vector<128x32xf32>, vector<8x128xf32> -> vector<8x128xf32>
    %5 = tpu.iota {dimensions = array<i32: 1>} : vector<8x128xi32>
    %c16_i32 = arith.constant 16 : i32
    %6 = vector.broadcast %c16_i32 : i32 to vector<8x128xi32>
    %7 = arith.cmpi slt, %5, %6 : vector<8x128xi32>
    %cst_7 = arith.constant 2.000000e+00 : f32
    %8 = vector.broadcast %cst_7 : f32 to vector<8x128xf32>
    %9 = arith.mulf %4, %8 : vector<8x128xf32>
    %cst_8 = arith.constant -1.000000e+30 : f32
    %10 = vector.broadcast %cst_8 : f32 to vector<8x128xf32>
    %11 = arith.select %7, %9, %10 : vector<8x128xi1>, vector<8x128xf32>
    %cst_9 = arith.constant dense<0xFF800000> : vector<8xf32>
    %12 = vector.multi_reduction <maximumf>, %11, %cst_9 [1] : vector<8x128xf32> to vector<8xf32>
    %13 = vector.shape_cast %12 : vector<8xf32> to vector<8x1xf32>
    %14 = vector.broadcast %13 : vector<8x1xf32> to vector<8x128xf32>
    %15 = arith.subf %11, %14 : vector<8x128xf32>
    %16 = math.exp %15 : vector<8x128xf32>
    %cst_10 = arith.constant dense<0.000000e+00> : vector<8xf32>
    %17 = vector.multi_reduction <add>, %16, %cst_10 [1] : vector<8x128xf32> to vector<8xf32>
    %18 = vector.shape_cast %17 : vector<8xf32> to vector<8x1xf32>
    %19 = vector.broadcast %18 : vector<8x1xf32> to vector<8x128xf32>
    %20 = arith.divf %16, %19 : vector<8x128xf32>
    %cst_11 = arith.constant dense<0.000000e+00> : vector<8x128xf32>
    %21 = tpu.matmul %20, %2, %cst_11 {dimension_numbers = #tpu.dot_dimension_numbers<[1], [0], [0], [1], [0, 0, 1, 1], [], []>} : vector<8x128xf32>, vector<128x128xf32>, vector<8x128xf32> -> vector<8x128xf32>
    %22 = arith.mulf %20, %21 : vector<8x128xf32>
    %cst_12 = arith.constant dense<0.000000e+00> : vector<8xf32>
    %23 = vector.multi_reduction <add>, %22, %cst_12 [1] : vector<8x128xf32> to vector<8xf32>
    %24 = vector.shape_cast %23 : vector<8xf32> to vector<8x1xf32>
    %cst_13 = arith.constant 2.000000e+00 : f32
    %25 = vector.broadcast %cst_13 : f32 to vector<8x128xf32>
    %26 = arith.mulf %25, %21 : vector<8x128xf32>
    %27 = vector.broadcast %3 : vector<1x128xf32> to vector<8x128xf32>
    %28 = arith.subf %27, %26 : vector<8x128xf32>
    %cst_14 = arith.constant 1.000000e+30 : f32
    %29 = vector.broadcast %cst_14 : f32 to vector<8x128xf32>
    %30 = arith.select %7, %28, %29 : vector<8x128xi1>, vector<8x128xf32>
    %cst_15 = arith.constant dense<0x7F800000> : vector<8xf32>
    %31 = vector.multi_reduction <minimumf>, %30, %cst_15 [1] : vector<8x128xf32> to vector<8xf32>
    %32 = vector.shape_cast %31 : vector<8xf32> to vector<8x1xf32>
    %33 = vector.broadcast %32 : vector<8x1xf32> to vector<8x128xf32>
    %34 = arith.cmpf ole, %30, %33 : vector<8x128xf32>
    %c128_i32 = arith.constant 128 : i32
    %35 = vector.broadcast %c128_i32 : i32 to vector<8x128xi32>
    %36 = arith.select %34, %5, %35 : vector<8x128xi1>, vector<8x128xi32>
    %cst_16 = arith.constant dense<2147483647> : vector<8xi32>
    %37 = vector.multi_reduction <minsi>, %36, %cst_16 [1] : vector<8x128xi32> to vector<8xi32>
    %38 = vector.shape_cast %37 : vector<8xi32> to vector<8x1xi32>
    %39 = vector.broadcast %38 : vector<8x1xi32> to vector<8x128xi32>
    %40 = arith.cmpi eq, %5, %39 : vector<8x128xi32>
    %41 = arith.extui %40 : vector<8x128xi1> to vector<8x128xi32>
    %42 = arith.sitofp %41 : vector<8x128xi32> to vector<8x128xf32>
    %43 = arith.truncf %42 : vector<8x128xf32> to vector<8x128xbf16>
    %c0_17 = arith.constant 0 : index
    %c0_18 = arith.constant 0 : index
    %44 = vector.load %arg5[%c0_17, %c0_18] : memref<128x256xbf16, #tpu.memory_space<vmem>>, vector<128x256xbf16>
    %cst_19 = arith.constant dense<0.000000e+00> : vector<8x256xf32>
    %45 = tpu.matmul %43, %44, %cst_19 {dimension_numbers = #tpu.dot_dimension_numbers<[1], [0], [0], [1], [0, 0, 1, 1], [], []>} : vector<8x128xbf16>, vector<128x256xbf16>, vector<8x256xf32> -> vector<8x256xf32>
    %46 = arith.truncf %45 : vector<8x256xf32> to vector<8x256xbf16>
    %c0_20 = arith.constant 0 : index
    %c0_21 = arith.constant 0 : index
    %47 = vector.load %arg6[%c0_20, %c0_21] : memref<8x256xbf16, #tpu.memory_space<vmem>>, vector<8x256xbf16>
    tpu.vector_store %arg6[%c0_20, %c0_21], %46 {strides = array<i32>} : memref<8x256xbf16, #tpu.memory_space<vmem>>, vector<8x256xbf16>,
    %48 = arith.addf %32, %24 : vector<8x1xf32>
    %cst_22 = arith.constant 0.000000e+00 : f32
    %49 = vector.broadcast %cst_22 : f32 to vector<8x1xf32>
    %50 = arith.maximumf %48, %49 : vector<8x1xf32>
    %51 = tpu.iota {dimensions = array<i32: 0>} : vector<8x1xi32>
    %c8_i32 = arith.constant 8 : i32
    %52 = arith.muli %arg0, %c8_i32 : i32
    %53 = vector.broadcast %52 : i32 to vector<8x1xi32>
    %54 = arith.addi %51, %53 : vector<8x1xi32>
    %c8_i32_23 = arith.constant 8 : i32
    %55 = vector.broadcast %c8_i32_23 : i32 to vector<8x1xi32>
    %56 = arith.cmpi slt, %54, %55 : vector<8x1xi32>
    %cst_24 = arith.constant 0.000000e+00 : f32
    %57 = vector.broadcast %cst_24 : f32 to vector<8x1xf32>
    %58 = arith.select %56, %50, %57 : vector<8x1xi1>, vector<8x1xf32>
    %59 = vector.shape_cast %58 : vector<8x1xf32> to vector<1x8x1xf32>
    %cst_25 = arith.constant dense<0.000000e+00> : vector<1xf32>
    %60 = vector.multi_reduction <add>, %59, %cst_25 [1, 2] : vector<1x8x1xf32> to vector<1xf32>
    %61 = vector.shape_cast %60 : vector<1xf32> to vector<1x1x1xf32>
    %62 = vector.extract %61[0, 0, 0] : f32 from vector<1x1x1xf32>
    %cst_26 = arith.constant 2.44140625E-4 : f32
    %63 = arith.mulf %62, %cst_26 : f32
    %64 = vector.broadcast %63 : f32 to vector<1x1x1xf32>
    %c0_27 = arith.constant 0 : index
    %c0_28 = arith.constant 0 : index
    %c0_29 = arith.constant 0 : index
    %65 = vector.load %arg7[%c0_27, %c0_28, %c0_29] : memref<1x1x1xf32, #tpu.memory_space<vmem>>, vector<1x1x1xf32>
    tpu.vector_store %arg7[%c0_27, %c0_28, %c0_29], %64 {strides = array<i32>} : memref<1x1x1xf32, #tpu.memory_space<vmem>>, vector<1x1x1xf32>,
    return
  }
  func.func @transform_0(%arg0: i32) -> (i32, i32) {
    %c0_i32 = arith.constant 0 : i32
    %c0_i32_0 = arith.constant 0 : i32
    return %arg0, %c0_i32 : i32, i32
  }
  func.func @transform_1(%arg0: i32) -> (i32, i32) {
    %c0_i32 = arith.constant 0 : i32
    %c0_i32_0 = arith.constant 0 : i32
    %c0_i32_1 = arith.constant 0 : i32
    return %c0_i32, %c0_i32_0 : i32, i32
  }
  func.func @transform_2(%arg0: i32) -> (i32, i32) {
    %c0_i32 = arith.constant 0 : i32
    %c0_i32_0 = arith.constant 0 : i32
    %c0_i32_1 = arith.constant 0 : i32
    return %c0_i32, %c0_i32_0 : i32, i32
  }
  func.func @transform_3(%arg0: i32) -> (i32, i32) {
    %c0_i32 = arith.constant 0 : i32
    %c0_i32_0 = arith.constant 0 : i32
    %c0_i32_1 = arith.constant 0 : i32
    return %c0_i32, %c0_i32_0 : i32, i32
  }
  func.func @transform_4(%arg0: i32) -> (i32, i32) {
    %c0_i32 = arith.constant 0 : i32
    %c0_i32_0 = arith.constant 0 : i32
    %c0_i32_1 = arith.constant 0 : i32
    return %c0_i32, %c0_i32_0 : i32, i32
  }
  func.func @transform_5(%arg0: i32) -> (i32, i32) {
    %c0_i32 = arith.constant 0 : i32
    %c0_i32_0 = arith.constant 0 : i32
    return %arg0, %c0_i32 : i32, i32
  }
  func.func @transform_6(%arg0: i32) -> (i32, i32, i32) {
    %c0_i32 = arith.constant 0 : i32
    %c0_i32_0 = arith.constant 0 : i32
    %c0_i32_1 = arith.constant 0 : i32
    return %arg0, %c0_i32, %c0_i32_0 : i32, i32, i32
  }
}

module attributes {stable_mosaic.version = 11 : i64} {
  func.func @_vqprompt_kernel(%arg0: i32, %arg1: memref<8x32xf32, #tpu.memory_space<vmem>>, %arg2: memref<128x32xf32, #tpu.memory_space<vmem>>, %arg3: memref<128x128xf32, #tpu.memory_space<vmem>>, %arg4: memref<1x128xf32, #tpu.memory_space<vmem>>, %arg5: memref<128x256xbf16, #tpu.memory_space<vmem>>, %arg6: memref<8x256xbf16, #tpu.memory_space<vmem>>, %arg7: memref<1x1x1xf32, #tpu.memory_space<vmem>>) attributes {dimension_semantics = [#tpu.dimension_semantics<parallel>], iteration_bounds = array<i64: 1>, scalar_prefetch = 0 : i64, scratch_operands = 0 : i64, tpu.core_type = #tpu.core_type<tc>, window_params = [{transform_indices = @transform_0, window_bounds = array<i64: 8, 32>}, {pipeline_mode = #tpu.pipeline_mode<synchronous>, transform_indices = @transform_1, window_bounds = array<i64: 128, 32>}, {pipeline_mode = #tpu.pipeline_mode<synchronous>, transform_indices = @transform_2, window_bounds = array<i64: 128, 128>}, {pipeline_mode = #tpu.pipeline_mode<synchronous>, transform_indices = @transform_3, window_bounds = array<i64: 1, 128>}, {pipeline_mode = #tpu.pipeline_mode<synchronous>, transform_indices = @transform_4, window_bounds = array<i64: 128, 256>}, {transform_indices = @transform_5, window_bounds = array<i64: 8, 256>}, {transform_indices = @transform_6, window_bounds = array<i64: 1, 1, 1>}]} {
    %c0 = arith.constant 0 : index
    %c0_0 = arith.constant 0 : index
    %0 = vector.load %arg1[%c0, %c0_0] : memref<8x32xf32, #tpu.memory_space<vmem>>, vector<8x32xf32>
    %c0_1 = arith.constant 0 : index
    %c0_2 = arith.constant 0 : index
    %1 = vector.load %arg2[%c0_1, %c0_2] : memref<128x32xf32, #tpu.memory_space<vmem>>, vector<128x32xf32>
    %c0_3 = arith.constant 0 : index
    %c0_4 = arith.constant 0 : index
    %2 = vector.load %arg3[%c0_3, %c0_4] : memref<128x128xf32, #tpu.memory_space<vmem>>, vector<128x128xf32>
    %c0_5 = arith.constant 0 : index
    %c0_6 = arith.constant 0 : index
    %3 = vector.load %arg4[%c0_5, %c0_6] : memref<1x128xf32, #tpu.memory_space<vmem>>, vector<1x128xf32>
    %cst = arith.constant dense<0.000000e+00> : vector<8x128xf32>
    %4 = tpu.matmul %0, %1, %cst {dimension_numbers = #tpu.dot_dimension_numbers<[1], [1], [0], [0], [0, 0, 1, 0], [], []>} : vector<8x32xf32>, vector<128x32xf32>, vector<8x128xf32> -> vector<8x128xf32>
    %5 = tpu.iota {dimensions = array<i32: 1>} : vector<8x128xi32>
    %c16_i32 = arith.constant 16 : i32
    %6 = vector.broadcast %c16_i32 : i32 to vector<8x128xi32>
    %7 = arith.cmpi slt, %5, %6 : vector<8x128xi32>
    %cst_7 = arith.constant 2.000000e+00 : f32
    %8 = vector.broadcast %cst_7 : f32 to vector<8x128xf32>
    %9 = arith.mulf %4, %8 : vector<8x128xf32>
    %cst_8 = arith.constant -1.000000e+30 : f32
    %10 = vector.broadcast %cst_8 : f32 to vector<8x128xf32>
    %11 = arith.select %7, %9, %10 : vector<8x128xi1>, vector<8x128xf32>
    %cst_9 = arith.constant dense<0xFF800000> : vector<8xf32>
    %12 = vector.multi_reduction <maximumf>, %11, %cst_9 [1] : vector<8x128xf32> to vector<8xf32>
    %13 = vector.shape_cast %12 : vector<8xf32> to vector<8x1xf32>
    %14 = vector.broadcast %13 : vector<8x1xf32> to vector<8x128xf32>
    %15 = arith.subf %11, %14 : vector<8x128xf32>
    %16 = math.exp %15 : vector<8x128xf32>
    %cst_10 = arith.constant dense<0.000000e+00> : vector<8xf32>
    %17 = vector.multi_reduction <add>, %16, %cst_10 [1] : vector<8x128xf32> to vector<8xf32>
    %18 = vector.shape_cast %17 : vector<8xf32> to vector<8x1xf32>
    %19 = vector.broadcast %18 : vector<8x1xf32> to vector<8x128xf32>
    %20 = arith.divf %16, %19 : vector<8x128xf32>
    %cst_11 = arith.constant dense<0.000000e+00> : vector<8x128xf32>
    %21 = tpu.matmul %20, %2, %cst_11 {dimension_numbers = #tpu.dot_dimension_numbers<[1], [0], [0], [1], [0, 0, 1, 1], [], []>} : vector<8x128xf32>, vector<128x128xf32>, vector<8x128xf32> -> vector<8x128xf32>
    %22 = arith.mulf %20, %21 : vector<8x128xf32>
    %cst_12 = arith.constant dense<0.000000e+00> : vector<8xf32>
    %23 = vector.multi_reduction <add>, %22, %cst_12 [1] : vector<8x128xf32> to vector<8xf32>
    %24 = vector.shape_cast %23 : vector<8xf32> to vector<8x1xf32>
    %cst_13 = arith.constant 2.000000e+00 : f32
    %25 = vector.broadcast %cst_13 : f32 to vector<8x128xf32>
    %26 = arith.mulf %25, %21 : vector<8x128xf32>
    %27 = vector.broadcast %3 : vector<1x128xf32> to vector<8x128xf32>
    %28 = arith.subf %27, %26 : vector<8x128xf32>
    %cst_14 = arith.constant 1.000000e+30 : f32
    %29 = vector.broadcast %cst_14 : f32 to vector<8x128xf32>
    %30 = arith.select %7, %28, %29 : vector<8x128xi1>, vector<8x128xf32>
    %cst_15 = arith.constant dense<0x7F800000> : vector<8xf32>
    %31 = vector.multi_reduction <minimumf>, %30, %cst_15 [1] : vector<8x128xf32> to vector<8xf32>
    %32 = vector.shape_cast %31 : vector<8xf32> to vector<8x1xf32>
    %33 = vector.broadcast %32 : vector<8x1xf32> to vector<8x128xf32>
    %34 = arith.cmpf ole, %30, %33 : vector<8x128xf32>
    %c128_i32 = arith.constant 128 : i32
    %35 = vector.broadcast %c128_i32 : i32 to vector<8x128xi32>
    %36 = arith.select %34, %5, %35 : vector<8x128xi1>, vector<8x128xi32>
    %cst_16 = arith.constant dense<2147483647> : vector<8xi32>
    %37 = vector.multi_reduction <minsi>, %36, %cst_16 [1] : vector<8x128xi32> to vector<8xi32>
    %38 = vector.shape_cast %37 : vector<8xi32> to vector<8x1xi32>
    %39 = vector.broadcast %38 : vector<8x1xi32> to vector<8x128xi32>
    %40 = arith.cmpi eq, %5, %39 : vector<8x128xi32>
    %41 = arith.extui %40 : vector<8x128xi1> to vector<8x128xi32>
    %42 = arith.sitofp %41 : vector<8x128xi32> to vector<8x128xf32>
    %43 = arith.truncf %42 : vector<8x128xf32> to vector<8x128xbf16>
    %c0_17 = arith.constant 0 : index
    %c0_18 = arith.constant 0 : index
    %44 = vector.load %arg5[%c0_17, %c0_18] : memref<128x256xbf16, #tpu.memory_space<vmem>>, vector<128x256xbf16>
    %cst_19 = arith.constant dense<0.000000e+00> : vector<8x256xf32>
    %45 = tpu.matmul %43, %44, %cst_19 {dimension_numbers = #tpu.dot_dimension_numbers<[1], [0], [0], [1], [0, 0, 1, 1], [], []>} : vector<8x128xbf16>, vector<128x256xbf16>, vector<8x256xf32> -> vector<8x256xf32>
    %46 = arith.truncf %45 : vector<8x256xf32> to vector<8x256xbf16>
    %c0_20 = arith.constant 0 : index
    %c0_21 = arith.constant 0 : index
    %47 = vector.load %arg6[%c0_20, %c0_21] : memref<8x256xbf16, #tpu.memory_space<vmem>>, vector<8x256xbf16>
    tpu.vector_store %arg6[%c0_20, %c0_21], %46 {strides = array<i32>} : memref<8x256xbf16, #tpu.memory_space<vmem>>, vector<8x256xbf16>,
    %48 = arith.addf %32, %24 : vector<8x1xf32>
    %cst_22 = arith.constant 0.000000e+00 : f32
    %49 = vector.broadcast %cst_22 : f32 to vector<8x1xf32>
    %50 = arith.maximumf %48, %49 : vector<8x1xf32>
    %51 = tpu.iota {dimensions = array<i32: 0>} : vector<8x1xi32>
    %c8_i32 = arith.constant 8 : i32
    %52 = arith.muli %arg0, %c8_i32 : i32
    %53 = vector.broadcast %52 : i32 to vector<8x1xi32>
    %54 = arith.addi %51, %53 : vector<8x1xi32>
    %c8_i32_23 = arith.constant 8 : i32
    %55 = vector.broadcast %c8_i32_23 : i32 to vector<8x1xi32>
    %56 = arith.cmpi slt, %54, %55 : vector<8x1xi32>
    %cst_24 = arith.constant 0.000000e+00 : f32
    %57 = vector.broadcast %cst_24 : f32 to vector<8x1xf32>
    %58 = arith.select %56, %50, %57 : vector<8x1xi1>, vector<8x1xf32>
    %59 = vector.shape_cast %58 : vector<8x1xf32> to vector<1x8x1xf32>
    %cst_25 = arith.constant dense<0.000000e+00> : vector<1xf32>
    %60 = vector.multi_reduction <add>, %59, %cst_25 [1, 2] : vector<1x8x1xf32> to vector<1xf32>
    %61 = vector.shape_cast %60 : vector<1xf32> to vector<1x1x1xf32>
    %62 = vector.extract %61[0, 0, 0] : f32 from vector<1x1x1xf32>
    %cst_26 = arith.constant 2.44140625E-4 : f32
    %63 = arith.mulf %62, %cst_26 : f32
    %64 = vector.broadcast %63 : f32 to vector<1x1x1xf32>
    %c0_27 = arith.constant 0 : index
    %c0_28 = arith.constant 0 : index
    %c0_29 = arith.constant 0 : index
    %65 = vector.load %arg7[%c0_27, %c0_28, %c0_29] : memref<1x1x1xf32, #tpu.memory_space<vmem>>, vector<1x1x1xf32>
    tpu.vector_store %arg7[%c0_27, %c0_28, %c0_29], %64 {strides = array<i32>} : memref<1x1x1xf32, #tpu.memory_space<vmem>>, vector<1x1x1xf32>,
    return
  }
  func.func @transform_0(%arg0: i32) -> (i32, i32) {
    %c0_i32 = arith.constant 0 : i32
    %c0_i32_0 = arith.constant 0 : i32
    return %arg0, %c0_i32 : i32, i32
  }
  func.func @transform_1(%arg0: i32) -> (i32, i32) {
    %c0_i32 = arith.constant 0 : i32
    %c0_i32_0 = arith.constant 0 : i32
    %c0_i32_1 = arith.constant 0 : i32
    return %c0_i32, %c0_i32_0 : i32, i32
  }
  func.func @transform_2(%arg0: i32) -> (i32, i32) {
    %c0_i32 = arith.constant 0 : i32
    %c0_i32_0 = arith.constant 0 : i32
    %c0_i32_1 = arith.constant 0 : i32
    return %c0_i32, %c0_i32_0 : i32, i32
  }
  func.func @transform_3(%arg0: i32) -> (i32, i32) {
    %c0_i32 = arith.constant 0 : i32
    %c0_i32_0 = arith.constant 0 : i32
    %c0_i32_1 = arith.constant 0 : i32
    return %c0_i32, %c0_i32_0 : i32, i32
  }
  func.func @transform_4(%arg0: i32) -> (i32, i32) {
    %c0_i32 = arith.constant 0 : i32
    %c0_i32_0 = arith.constant 0 : i32
    %c0_i32_1 = arith.constant 0 : i32
    return %c0_i32, %c0_i32_0 : i32, i32
  }
  func.func @transform_5(%arg0: i32) -> (i32, i32) {
    %c0_i32 = arith.constant 0 : i32
    %c0_i32_0 = arith.constant 0 : i32
    return %arg0, %c0_i32 : i32, i32
  }
  func.func @transform_6(%arg0: i32) -> (i32, i32, i32) {
    %c0_i32 = arith.constant 0 : i32
    %c0_i32_0 = arith.constant 0 : i32
    %c0_i32_1 = arith.constant 0 : i32
    return %arg0, %c0_i32, %c0_i32_0 : i32, i32, i32
  }
}

</mosaic_0001>

<llo_original>
// kernel: tpu_custom_call.1
$region0: #{tpu_custom_call.1}
  #allocation0 [shape = 'u32[]', space=smem, size = 0x4, offset = 0x4, fixed_abs, tag = 'smem constant byte address 0x4 - core index']
  #allocation1 [shape = 'u32[144,128]{1,0:T(1,128)}', space=vmem, size = 0x12000, scoped, tag = 'internal scratch']
  %s0 = inlined_call_operand.vmem [shape: f32[8,32], index: 0, kind: input, shape index: {}]
  %s1 = inlined_call_operand.vmem [shape: f32[128,32], index: 1, kind: input, shape index: {}]
  %s2 = inlined_call_operand.vmem [shape: f32[128,128], index: 2, kind: input, shape index: {}]
  %s3 = inlined_call_operand.vmem [shape: f32[1,128], index: 3, kind: input, shape index: {}]
  %s4 = inlined_call_operand.hbm [shape: bf16[128,256], index: 4, kind: input, shape index: {}]
  %s5 = inlined_call_operand.hbm [shape: bf16[8,256], index: 5, kind: output, shape index: {0}]
  %s6 = inlined_call_operand.hbm [shape: f32[1,1,1], index: 6, kind: output, shape index: {1}]
  %7 = xla_tuple %s5, %s6
  %s8 = sld [smem:[#allocation0]]
  $region42: #{tpu_custom_call.1} parent=0
    _
  %s10 = ssub.s32 1, %s8
  %s11 = scalar_select 0, %s10, %s8
  $region1: #{tpu_custom_call.1} parent=0
    #allocation2 [shape = 'u8[65536]{0}', space=vmem, size = 0x10000, scoped, tag = 'input window, operand 4, single buffered']
    #allocation3 [shape = 's32[1]{0}', space=sflag, size = 0x4, scoped, tag = 'scoped memory for tpu_custom_call.1']
    #allocation4 [shape = 's32[1]{0}', space=sflag, size = 0x4, scoped, tag = 'scoped memory for tpu_custom_call.1']
    #allocation5 [shape = 'u8[4096]{0}', space=vmem, size = 0x1000, scoped, tag = 'output window, operand 0, single buffered']
    #allocation6 [shape = 'u8[512]{0}', space=vmem, size = 0x400, scoped, tag = 'output window, operand 1, single buffered']
    #allocation7 [shape = 's32[1]{0}', space=sflag, size = 0x4, scoped, tag = 'scoped memory for tpu_custom_call.1']
    %12 = vsyncpa [#allocation3], 0
    %13 = vsyncpa [#allocation4], 0
    %14 = vsyncpa [#allocation7], 0
    // Predicated region
    $region2: #{tpu_custom_call.1} parent=1 // pred_check
      _
    $region3: #{tpu_custom_call.1} parent=1 // pred_check_branch
      %16 = sbr.rel (0) target = $region5
    $region4: #{tpu_custom_call.1} parent=1 // pred_region
      _
    $region5: #{tpu_custom_call.1} parent=1 // pred_fallthru
      _
    // Predicated region
    $region6: #{tpu_custom_call.1} parent=1 // pred_check
      _
    $region7: #{tpu_custom_call.1} parent=1 // pred_check_branch
      %18 = sbr.rel (0) target = $region9
    $region8: #{tpu_custom_call.1} parent=1 // pred_region
      _
    $region9: #{tpu_custom_call.1} parent=1 // pred_fallthru
      _
    // Predicated region
    $region10: #{tpu_custom_call.1} parent=1 // pred_check
      _
    $region11: #{tpu_custom_call.1} parent=1 // pred_check_branch
      %20 = sbr.rel (0) target = $region13
    $region12: #{tpu_custom_call.1} parent=1 // pred_region
      _
    $region13: #{tpu_custom_call.1} parent=1 // pred_fallthru
      _
    // Predicated region
    $region14: #{tpu_custom_call.1} parent=1 // pred_check
      _
    $region15: #{tpu_custom_call.1} parent=1 // pred_check_branch
      %22 = sbr.rel (0) target = $region17
    $region16: #{tpu_custom_call.1} parent=1 // pred_region
      _
    $region17: #{tpu_custom_call.1} parent=1 // pred_fallthru
      _
    // Predicated region
    $region18: #{tpu_custom_call.1} parent=1 // pred_check
      _
    $region19: #{tpu_custom_call.1} parent=1 // pred_check_branch
      %24 = sbr.rel (0) target = $region21
    $region20: #{tpu_custom_call.1} parent=1 // pred_region
      %s26 = ssub.s32 2048, 2048
      %27 = vsyncadd [#allocation3], %s26
      %s28 = sshll.u32 [#allocation2], 4
      %s29 = int_to_ptr.vmem [resolvable:$true] %s28
      %34 = dma.hbm_to_vmem [thread:$0]  %s4, 2048, %s29, [#allocation3], 128, 128, 8
    $region21: #{tpu_custom_call.1} parent=1 // pred_fallthru
      _
    // Predicated region
    $region22: #{tpu_custom_call.1} parent=1 // pred_check
      _
    $region23: #{tpu_custom_call.1} parent=1 // pred_check_branch
      %36 = sbr.rel (0) target = $region25
    $region24: #{tpu_custom_call.1} parent=1 // pred_region
      %37 = dma.done [#allocation3], 2048
    $region25: #{tpu_custom_call.1} parent=1 // pred_fallthru
      _
    %v39 = vld [vmem:[%s0] sm:$0xff]
    %v40 = vld [vmem:[%s1] sm:$0xff]
    %v41 = vld [vmem:[%s1 + $0x8] sm:$0xff]
    %v42 = vld [vmem:[%s1 + $0x10] sm:$0xff]
    %v43 = vld [vmem:[%s1 + $0x18] sm:$0xff]
    %v44 = vld [vmem:[%s1 + $0x20] sm:$0xff]
    %v45 = vld [vmem:[%s1 + $0x28] sm:$0xff]
    %v46 = vld [vmem:[%s1 + $0x30] sm:$0xff]
    %v47 = vld [vmem:[%s1 + $0x38] sm:$0xff]
    %v48 = vld [vmem:[%s1 + $0x40] sm:$0xff]
    %v49 = vld [vmem:[%s1 + $0x48] sm:$0xff]
    %v50 = vld [vmem:[%s1 + $0x50] sm:$0xff]
    %v51 = vld [vmem:[%s1 + $0x58] sm:$0xff]
    %v52 = vld [vmem:[%s1 + $0x60] sm:$0xff]
    %v53 = vld [vmem:[%s1 + $0x68] sm:$0xff]
    %v54 = vld [vmem:[%s1 + $0x70] sm:$0xff]
    %v55 = vld [vmem:[%s1 + $0x78] sm:$0xff]
    %v56 = vld [vmem:[%s2] sm:$0xff]
    %v57 = vld [vmem:[%s2 + $0x8] sm:$0xff]
    %v58 = vld [vmem:[%s2 + $0x10] sm:$0xff]
    %v59 = vld [vmem:[%s2 + $0x18] sm:$0xff]
    %v60 = vld [vmem:[%s2 + $0x20] sm:$0xff]
    %v61 = vld [vmem:[%s2 + $0x28] sm:$0xff]
    %v62 = vld [vmem:[%s2 + $0x30] sm:$0xff]
    %v63 = vld [vmem:[%s2 + $0x38] sm:$0xff]
    %v64 = vld [vmem:[%s2 + $0x40] sm:$0xff]
    %v65 = vld [vmem:[%s2 + $0x48] sm:$0xff]
    %v66 = vld [vmem:[%s2 + $0x50] sm:$0xff]
    %v67 = vld [vmem:[%s2 + $0x58] sm:$0xff]
    %v68 = vld [vmem:[%s2 + $0x60] sm:$0xff]
    %v69 = vld [vmem:[%s2 + $0x68] sm:$0xff]
    %v70 = vld [vmem:[%s2 + $0x70] sm:$0xff]
    %v71 = vld [vmem:[%s2 + $0x78] sm:$0xff]
    %v72 = vld [vmem:[%s3] sm:$0x1]
    %vm73 = vcmask 261120
    %v75 = vsel %vm73, %v39, 0
    %v78 = vsel %vm73, %v40, 0
    %v81 = vsel %vm73, %v41, 0
    %v84 = vsel %vm73, %v42, 0
    %v87 = vsel %vm73, %v43, 0
    %v90 = vsel %vm73, %v44, 0
    %v93 = vsel %vm73, %v45, 0
    %v96 = vsel %vm73, %v46, 0
    %v99 = vsel %vm73, %v47, 0
    %v102 = vsel %vm73, %v48, 0
    %v105 = vsel %vm73, %v49, 0
    %v108 = vsel %vm73, %v50, 0
    %v111 = vsel %vm73, %v51, 0
    %v114 = vsel %vm73, %v52, 0
    %v117 = vsel %vm73, %v53, 0
    %v120 = vsel %vm73, %v54, 0
    %v123 = vsel %vm73, %v55, 0
    %125 = vmatprep.subr.mxu0 0.0
    %126 = vmatpush1.xpose.msra.mxu0 %v123
    %127 = vmatprep.subr.mxu0 0.0
    %128 = vmatpush1.xpose.msra.mxu0 %v120
    %129 = vmatprep.subr.mxu0 0.0
    %130 = vmatpush1.xpose.msra.mxu0 %v117
    %131 = vmatprep.subr.mxu0 0.0
    %132 = vmatpush1.xpose.msra.mxu0 %v114
    %133 = vmatprep.subr.mxu0 0.0
    %134 = vmatpush1.xpose.msra.mxu0 %v111
    %135 = vmatprep.subr.mxu0 0.0
    %136 = vmatpush1.xpose.msra.mxu0 %v108
    %137 = vmatprep.subr.mxu0 0.0
    %138 = vmatpush1.xpose.msra.mxu0 %v105
    %139 = vmatprep.subr.mxu0 0.0
    %140 = vmatpush1.xpose.msra.mxu0 %v102
    %141 = vmatprep.subr.mxu0 0.0
    %142 = vmatpush1.xpose.msra.mxu0 %v99
    %143 = vmatprep.subr.mxu0 0.0
    %144 = vmatpush1.xpose.msra.mxu0 %v96
    %145 = vmatprep.subr.mxu0 0.0
    %146 = vmatpush1.xpose.msra.mxu0 %v93
    %147 = vmatprep.subr.mxu0 0.0
    %148 = vmatpush1.xpose.msra.mxu0 %v90
    %149 = vmatprep.subr.mxu0 0.0
    %150 = vmatpush1.xpose.msra.mxu0 %v87
    %151 = vmatprep.subr.mxu0 0.0
    %152 = vmatpush1.xpose.msra.mxu0 %v84
    %153 = vmatprep.subr.mxu0 0.0
    %154 = vmatpush1.xpose.msra.mxu0 %v81
    %155 = vmatprep.subr.mxu0 0.0
    %156 = vmatpush1.xpose.msra.mxu0 %v78
    %157 = vmatprep.subr.mxu0 0.0
    %158 = vmatpush2.xpose.msra.mxu0 0.0
    %159 = vmatprep.subr.mxu0 0.0
    %160 = vmatpush2.xpose.msra.mxu0 0.0
    %161 = vmatprep.subr.mxu0 0.0
    %162 = vmatpush2.xpose.msra.mxu0 0.0
    %163 = vmatprep.subr.mxu0 0.0
    %164 = vmatpush2.xpose.msra.mxu0 0.0
    %165 = vmatprep.subr.mxu0 0.0
    %166 = vmatpush2.xpose.msra.mxu0 0.0
    %167 = vmatprep.subr.mxu0 0.0
    %168 = vmatpush2.xpose.msra.mxu0 0.0
    %169 = vmatprep.subr.mxu0 0.0
    %170 = vmatpush2.xpose.msra.mxu0 0.0
    %171 = vmatprep.subr.mxu0 0.0
    %172 = vmatpush2.xpose.msra.mxu0 0.0
    %173 = vmatprep.subr.mxu0 0.0
    %174 = vmatpush2.xpose.msra.mxu0 0.0
    %175 = vmatprep.subr.mxu0 0.0
    %176 = vmatpush2.xpose.msra.mxu0 0.0
    %177 = vmatprep.subr.mxu0 0.0
    %178 = vmatpush2.xpose.msra.mxu0 0.0
    %179 = vmatprep.subr.mxu0 0.0
    %180 = vmatpush2.xpose.msra.mxu0 0.0
    %181 = vmatprep.subr.mxu0 0.0
    %182 = vmatpush2.xpose.msra.mxu0 0.0
    %183 = vmatprep.subr.mxu0 0.0
    %184 = vmatpush2.xpose.msra.mxu0 0.0
    %185 = vmatprep.subr.mxu0 0.0
    %186 = vmatpush2.xpose.msra.mxu0 0.0
    %187 = vmatprep.subr.mxu0 0.0
    %188 = vmatpush2.xpose.msra.mxu0 0.0
    %189 = vmatprep.mubr.f32.mxu0 0.0
    %190 = vmatmul.mubr.f32.gmra.mxu0 %v75
    %v191 = vpop.f32.mrf.mxu0
    %v192 = vadd.f32 0.0, %v191
    %v193 = vpop.f32.mrf.mxu0
    %194 = vdwg.mxu0
    %v195 = vlaneseq
    %v196 = vand.u32 %v195, 127
    %vm197 = vcmp.lt.s32.totalorder %v196, 16
    %v198 = vmul.f32 %v192, 2.0
    %v199 = vsel %vm197, %v198, -1e+30
    %200 = vmax.xlane.f32.xlu0 %v199
    %v201 = vpop.xlane.xlu0 %200
    %v202 = vsub.f32 %v199, %v201
    %v203 = vmul.f32 %v202, 1.442695
    %v204 = vpow.pop %v203
    %205 = vadd.xlane.f32.xlu0 %v204
    %v206 = vpop.xlane.xlu0 %205
    %v207 = vrcp.pop %v206
    %v208 = vmul.f32 %v204, %v207
    %209 = vmatprep.subr.mxu0 0.0
    %210 = vmatpush1.msra.mxu0 %v71
    %211 = vmatprep.subr.mxu0 0.0
    %212 = vmatpush1.msra.mxu0 %v70
    %213 = vmatprep.subr.mxu0 0.0
    %214 = vmatpush1.msra.mxu0 %v69
    %215 = vmatprep.subr.mxu0 0.0
    %216 = vmatpush1.msra.mxu0 %v68
    %217 = vmatprep.subr.mxu0 0.0
    %218 = vmatpush1.msra.mxu0 %v67
    %219 = vmatprep.subr.mxu0 0.0
    %220 = vmatpush1.msra.mxu0 %v66
    %221 = vmatprep.subr.mxu0 0.0
    %222 = vmatpush1.msra.mxu0 %v65
    %223 = vmatprep.subr.mxu0 0.0
    %224 = vmatpush1.msra.mxu0 %v64
    %225 = vmatprep.subr.mxu0 0.0
    %226 = vmatpush1.msra.mxu0 %v63
    %227 = vmatprep.subr.mxu0 0.0
    %228 = vmatpush1.msra.mxu0 %v62
    %229 = vmatprep.subr.mxu0 0.0
    %230 = vmatpush1.msra.mxu0 %v61
    %231 = vmatprep.subr.mxu0 0.0
    %232 = vmatpush1.msra.mxu0 %v60
    %233 = vmatprep.subr.mxu0 0.0
    %234 = vmatpush1.msra.mxu0 %v59
    %235 = vmatprep.subr.mxu0 0.0
    %236 = vmatpush1.msra.mxu0 %v58
    %237 = vmatprep.subr.mxu0 0.0
    %238 = vmatpush1.msra.mxu0 %v57
    %239 = vmatprep.subr.mxu0 0.0
    %240 = vmatpush1.msra.mxu0 %v56
    %241 = vmatprep.subr.mxu0 0.0
    %242 = vmatpush2.msra.mxu0 0.0
    %243 = vmatprep.subr.mxu0 0.0
    %244 = vmatpush2.msra.mxu0 0.0
    %245 = vmatprep.subr.mxu0 0.0
    %246 = vmatpush2.msra.mxu0 0.0
    %247 = vmatprep.subr.mxu0 0.0
    %248 = vmatpush2.msra.mxu0 0.0
    %249 = vmatprep.subr.mxu0 0.0
    %250 = vmatpush2.msra.mxu0 0.0
    %251 = vmatprep.subr.mxu0 0.0
    %252 = vmatpush2.msra.mxu0 0.0
    %253 = vmatprep.subr.mxu0 0.0
    %254 = vmatpush2.msra.mxu0 0.0
    %255 = vmatprep.subr.mxu0 0.0
    %256 = vmatpush2.msra.mxu0 0.0
    %257 = vmatprep.subr.mxu0 0.0
    %258 = vmatpush2.msra.mxu0 0.0
    %259 = vmatprep.subr.mxu0 0.0
    %260 = vmatpush2.msra.mxu0 0.0
    %261 = vmatprep.subr.mxu0 0.0
    %262 = vmatpush2.msra.mxu0 0.0
    %263 = vmatprep.subr.mxu0 0.0
    %264 = vmatpush2.msra.mxu0 0.0
    %265 = vmatprep.subr.mxu0 0.0
    %266 = vmatpush2.msra.mxu0 0.0
    %267 = vmatprep.subr.mxu0 0.0
    %268 = vmatpush2.msra.mxu0 0.0
    %269 = vmatprep.subr.mxu0 0.0
    %270 = vmatpush2.msra.mxu0 0.0
    %271 = vmatprep.subr.mxu0 0.0
    %272 = vmatpush2.msra.mxu0 0.0
    %273 = vmatprep.mubr.f32.mxu0 0.0
    %274 = vmatmul.mubr.f32.gmra.mxu0 %v208
    %v275 = vpop.f32.mrf.mxu0
    %v276 = vadd.f32 0.0, %v275
    %v277 = vpop.f32.mrf.mxu0
    %278 = vdwg.mxu0
    %v279 = vmul.f32 %v208, %v276
    %280 = vadd.xlane.f32.xlu0 %v279
    %v281 = vpop.xlane.xlu0 %280
    %v282 = vmul.f32 %v276, 2.0
    %v284 = vlaneseq
    %v285 = vshrl.u32 %v284, 7
    %v286 = vsub.s32 0, %v285
    %v287 = vrot.slane %v72, %v286
    %v289 = vsub.f32 %v287, %v282
    %v290 = vsel %vm197, %v289, 1e+30
    %291 = vmin.xlane.f32.xlu0 %v290
    %v292 = vpop.xlane.xlu0 %291
    %vm293 = vcmp.le.f32.partialorder %v290, %v292
    %v294 = vsel %vm293, %v196, 128
    %v295 = vand.u32 %v294, 65535
    %v296 = vshra.s32 %v294, 16
    %v297 = vcvt.s32.f32 %v295
    %v298 = vcvt.s32.f32 %v296
    %299 = vmin.xlane.f32.xlu0 %v298
    %v300 = vpop.xlane.xlu0 %299
    %vm301 = vcmp.eq.f32.partialorder %v298, %v300
    %v302 = vsel %vm301, %v297, inf
    %303 = vmin.xlane.f32.xlu0 %v302
    %v304 = vpop.xlane.xlu0 %303
    %v305 = vcvt.f32.s32 %v304
    %v306 = vcvt.f32.s32 %v300
    %v307 = vshll.u32 %v306, 16
    %v308 = vadd.s32 %v307, %v305
    %vm309 = vcmp.eq.s32.totalorder %v196, %v308
    %v310 = vsel %vm309, 1, 0
    %v311 = vcvt.s32.f32 %v310
    %v312 = vpack.c.bf16 %v311, %v311
    %v313 = vld [vmem:[#allocation2] sm:$0xff]
    %v314 = vld [vmem:[#allocation2 + $0x8] sm:$0xff]
    %v315 = vld [vmem:[#allocation2 + $0x10] sm:$0xff]
    %v316 = vld [vmem:[#allocation2 + $0x18] sm:$0xff]
    %v317 = vld [vmem:[#allocation2 + $0x20] sm:$0xff]
    %v318 = vld [vmem:[#allocation2 + $0x28] sm:$0xff]
    %v319 = vld [vmem:[#allocation2 + $0x30] sm:$0xff]
    %v320 = vld [vmem:[#allocation2 + $0x38] sm:$0xff]
    %v321 = vld [vmem:[#allocation2 + $0x40] sm:$0xff]
    %v322 = vld [vmem:[#allocation2 + $0x48] sm:$0xff]
    %v323 = vld [vmem:[#allocation2 + $0x50] sm:$0xff]
    %v324 = vld [vmem:[#allocation2 + $0x58] sm:$0xff]
    %v325 = vld [vmem:[#allocation2 + $0x60] sm:$0xff]
    %v326 = vld [vmem:[#allocation2 + $0x68] sm:$0xff]
    %v327 = vld [vmem:[#allocation2 + $0x70] sm:$0xff]
    %v328 = vld [vmem:[#allocation2 + $0x78] sm:$0xff]
    %v345 = vunpack.c.l.b16 %v313
    %v346 = vunpack.c.h.b16 %v313
    %v347 = vunpack.c.l.b16 %v314
    %v348 = vunpack.c.h.b16 %v314
    %v349 = vunpack.c.l.b16 %v315
    %v350 = vunpack.c.h.b16 %v315
    %v351 = vunpack.c.l.b16 %v316
    %v352 = vunpack.c.h.b16 %v316
    %v353 = vunpack.c.l.b16 %v317
    %v354 = vunpack.c.h.b16 %v317
    %v355 = vunpack.c.l.b16 %v318
    %v356 = vunpack.c.h.b16 %v318
    %v357 = vunpack.c.l.b16 %v319
    %v358 = vunpack.c.h.b16 %v319
    %v359 = vunpack.c.l.b16 %v320
    %v360 = vunpack.c.h.b16 %v320
    %v361 = vunpack.c.l.b16 %v321
    %v362 = vunpack.c.h.b16 %v321
    %v363 = vunpack.c.l.b16 %v322
    %v364 = vunpack.c.h.b16 %v322
    %v365 = vunpack.c.l.b16 %v323
    %v366 = vunpack.c.h.b16 %v323
    %v367 = vunpack.c.l.b16 %v324
    %v368 = vunpack.c.h.b16 %v324
    %v369 = vunpack.c.l.b16 %v325
    %v370 = vunpack.c.h.b16 %v325
    %v371 = vunpack.c.l.b16 %v326
    %v372 = vunpack.c.h.b16 %v326
    %v373 = vunpack.c.l.b16 %v327
    %v374 = vunpack.c.h.b16 %v327
    %v375 = vunpack.c.l.b16 %v328
    %v376 = vunpack.c.h.b16 %v328
    %v377 = vpack.c.b16 %v347, %v345
    %v378 = vpack.c.b16 %v348, %v346
    %v379 = vpack.c.b16 %v351, %v349
    %v380 = vpack.c.b16 %v352, %v350
    %v381 = vpack.c.b16 %v355, %v353
    %v382 = vpack.c.b16 %v356, %v354
    %v383 = vpack.c.b16 %v359, %v357
    %v384 = vpack.c.b16 %v360, %v358
    %v385 = vpack.c.b16 %v363, %v361
    %v386 = vpack.c.b16 %v364, %v362
    %v387 = vpack.c.b16 %v367, %v365
    %v388 = vpack.c.b16 %v368, %v366
    %v389 = vpack.c.b16 %v371, %v369
    %v390 = vpack.c.b16 %v372, %v370
    %v391 = vpack.c.b16 %v375, %v373
    %v392 = vpack.c.b16 %v376, %v374
    %409 = vmatprep.subr.bf16.mxu0 %v392
    %410 = vmatpush1.bf16.msra.mxu0 %v391
    %411 = vmatprep.subr.bf16.mxu0 %v390
    %412 = vmatpush1.bf16.msra.mxu0 %v389
    %413 = vmatprep.subr.bf16.mxu0 %v388
    %414 = vmatpush1.bf16.msra.mxu0 %v387
    %415 = vmatprep.subr.bf16.mxu0 %v386
    %416 = vmatpush1.bf16.msra.mxu0 %v385
    %417 = vmatprep.subr.bf16.mxu0 %v384
    %418 = vmatpush1.bf16.msra.mxu0 %v383
    %419 = vmatprep.subr.bf16.mxu0 %v382
    %420 = vmatpush1.bf16.msra.mxu0 %v381
    %421 = vmatprep.subr.bf16.mxu0 %v380
    %422 = vmatpush1.bf16.msra.mxu0 %v379
    %423 = vmatprep.subr.bf16.mxu0 %v378
    %424 = vmatpush1.bf16.msra.mxu0 %v377
    %425 = vmatprep.subr.bf16.mxu0 0
    %426 = vmatpush2.bf16.msra.mxu0 0
    %427 = vmatprep.subr.bf16.mxu0 0
    %428 = vmatpush2.bf16.msra.mxu0 0
    %429 = vmatprep.subr.bf16.mxu0 0
    %430 = vmatpush2.bf16.msra.mxu0 0
    %431 = vmatprep.subr.bf16.mxu0 0
    %432 = vmatpush2.bf16.msra.mxu0 0
    %433 = vmatprep.subr.bf16.mxu0 0
    %434 = vmatpush2.bf16.msra.mxu0 0
    %435 = vmatprep.subr.bf16.mxu0 0
    %436 = vmatpush2.bf16.msra.mxu0 0
    %437 = vmatprep.subr.bf16.mxu0 0
    %438 = vmatpush2.bf16.msra.mxu0 0
    %439 = vmatprep.subr.bf16.mxu0 0
    %440 = vmatpush2.bf16.msra.mxu0 0
    %441 = vmatprep.mubr.bf16.mxu0 0
    %442 = vmatmul.mubr.bf16.gmra.mxu0 %v312
    %v443 = vpop.f32.mrf.mxu0
    %v444 = vadd.f32 0.0, %v443
    %v445 = vpop.f32.mrf.mxu0
    %v446 = vadd.f32 0.0, %v445
    %v447 = vpop.f32.mrf.mxu0
    %v448 = vpop.f32.mrf.mxu0
    %449 = vdwg.mxu0
    %v450 = vpack.c.bf16 %v444, %v444
    %v451 = vpack.c.bf16 %v446, %v446
    %v454 = vunpack.c.l.b16 %v450
    %v455 = vunpack.c.l.b16 %v451
    %v456 = vpack.c.b16 %v455, %v454
    %458 = vst [vmem:[#allocation5] sm:$0xff] %v456
    %v459 = vadd.f32 %v292, %v281
    %v460 = vmax.f32 %v459, 0.0
    %v461 = vlaneseq
    %v462 = vshrl.u32 %v461, 7
    %s463 = smul.u32 0, 8
    %v464 = vstv %s463
    %v465 = vadd.s32 %v462, %v464
    %vm466 = vcmp.lt.s32.totalorder %v465, 8
    %v467 = vsel %vm466, %v460, 0.0
    %vm468 = vcmask 7168
    %v469 = vsel %vm468, %v467, 0.0
    %470 = vadd.xlane.f32.xlu0 %v469
    %v471 = vpop.xlane.xlu0 %470
    %v472 = vrot.slane %v471, 4
    %v473 = vadd.f32 %v471, %v472
    %v474 = vrot.slane %v473, 2
    %v475 = vadd.f32 %v473, %v474
    %v476 = vrot.slane %v475, 1
    %v477 = vadd.f32 %v475, %v476
    %s478 = vtos %v477
    %s479 = smul.f32 %s478, 0.00024414063
    %v480 = vstv %s479
    %vm481 = vcmask 0
    %482 = vst.msk [vmem:[#allocation6] sm:$0x1] %vm481, %v480
    // Predicated region
    $region26: #{tpu_custom_call.1} parent=1 // pred_check
      _
    $region27: #{tpu_custom_call.1} parent=1 // pred_check_branch
      %484 = sbr.rel (0) target = $region29
    $region28: #{tpu_custom_call.1} parent=1 // pred_region
      %s486 = ssub.s32 128, 128
      %487 = vsyncadd [#allocation4], %s486
      %s489 = sshll.u32 [#allocation5], 4
      %s490 = int_to_ptr.vmem [resolvable:$true] %s489
      %492 = dma.vmem_to_hbm [thread:$0]  %s490, 128, %s5, [#allocation4]
    $region29: #{tpu_custom_call.1} parent=1 // pred_fallthru
      _
    // Predicated region
    $region30: #{tpu_custom_call.1} parent=1 // pred_check
      _
    $region31: #{tpu_custom_call.1} parent=1 // pred_check_branch
      %494 = sbr.rel (0) target = $region33
    $region32: #{tpu_custom_call.1} parent=1 // pred_region
      %s496 = ssub.s32 16, 16
      %497 = vsyncadd [#allocation7], %s496
      %s499 = sshll.u32 [#allocation6], 4
      %s500 = int_to_ptr.vmem [resolvable:$true] %s499
      %502 = dma.vmem_to_hbm [thread:$0]  %s500, 16, %s6, [#allocation7]
    $region33: #{tpu_custom_call.1} parent=1 // pred_fallthru
      _
    // Predicated region
    $region34: #{tpu_custom_call.1} parent=1 // pred_check
      _
    $region35: #{tpu_custom_call.1} parent=1 // pred_check_branch
      %504 = sbr.rel (0) target = $region37
    $region36: #{tpu_custom_call.1} parent=1 // pred_region
      %505 = dma.done [#allocation4], 128
    $region37: #{tpu_custom_call.1} parent=1 // pred_fallthru
      _
    // Predicated region
    $region38: #{tpu_custom_call.1} parent=1 // pred_check
      _
    $region39: #{tpu_custom_call.1} parent=1 // pred_check_branch
      %507 = sbr.rel (0) target = $region41
    $region40: #{tpu_custom_call.1} parent=1 // pred_region
      %508 = dma.done [#allocation7], 16
    $region41: #{tpu_custom_call.1} parent=1 // pred_fallthru
      _
    %509 = vsyncpa [#allocation3], 1
    %510 = vsyncpa [#allocation4], 1
    %511 = vsyncpa [#allocation7], 1

// kernel: tpu_custom_call.1
$region0: #{tpu_custom_call.1}
  #allocation0 [shape = 'u32[]', space=smem, size = 0x4, offset = 0x4, fixed_abs, tag = 'smem constant byte address 0x4 - core index']
  #allocation1 [shape = 'u32[144,128]{1,0:T(1,128)}', space=vmem, size = 0x12000, scoped, tag = 'internal scratch']
  %s0 = inlined_call_operand.vmem [shape: f32[8,32], index: 0, kind: input, shape index: {}]
  %s1 = inlined_call_operand.vmem [shape: f32[128,32], index: 1, kind: input, shape index: {}]
  %s2 = inlined_call_operand.vmem [shape: f32[128,128], index: 2, kind: input, shape index: {}]
  %s3 = inlined_call_operand.vmem [shape: f32[1,128], index: 3, kind: input, shape index: {}]
  %s4 = inlined_call_operand.hbm [shape: bf16[128,256], index: 4, kind: input, shape index: {}]
  %s5 = inlined_call_operand.hbm [shape: bf16[8,256], index: 5, kind: output, shape index: {0}]
  %s6 = inlined_call_operand.hbm [shape: f32[1,1,1], index: 6, kind: output, shape index: {1}]
  %7 = xla_tuple %s5, %s6
  %s8 = sld [smem:[#allocation0]]
  $region42: #{tpu_custom_call.1} parent=0
    _
  %s10 = ssub.s32 1, %s8
  %s11 = scalar_select 0, %s10, %s8
  $region1: #{tpu_custom_call.1} parent=0
    #allocation2 [shape = 'u8[65536]{0}', space=vmem, size = 0x10000, scoped, tag = 'input window, operand 4, single buffered']
    #allocation3 [shape = 's32[1]{0}', space=sflag, size = 0x4, scoped, tag = 'scoped memory for tpu_custom_call.1']
    #allocation4 [shape = 's32[1]{0}', space=sflag, size = 0x4, scoped, tag = 'scoped memory for tpu_custom_call.1']
    #allocation5 [shape = 'u8[4096]{0}', space=vmem, size = 0x1000, scoped, tag = 'output window, operand 0, single buffered']
    #allocation6 [shape = 'u8[512]{0}', space=vmem, size = 0x400, scoped, tag = 'output window, operand 1, single buffered']
    #allocation7 [shape = 's32[1]{0}', space=sflag, size = 0x4, scoped, tag = 'scoped memory for tpu_custom_call.1']
    %12 = vsyncpa [#allocation3], 0
    %13 = vsyncpa [#allocation4], 0
    %14 = vsyncpa [#allocation7], 0
    // Predicated region
    $region2: #{tpu_custom_call.1} parent=1 // pred_check
      _
    $region3: #{tpu_custom_call.1} parent=1 // pred_check_branch
      %16 = sbr.rel (0) target = $region5
    $region4: #{tpu_custom_call.1} parent=1 // pred_region
      _
    $region5: #{tpu_custom_call.1} parent=1 // pred_fallthru
      _
    // Predicated region
    $region6: #{tpu_custom_call.1} parent=1 // pred_check
      _
    $region7: #{tpu_custom_call.1} parent=1 // pred_check_branch
      %18 = sbr.rel (0) target = $region9
    $region8: #{tpu_custom_call.1} parent=1 // pred_region
      _
    $region9: #{tpu_custom_call.1} parent=1 // pred_fallthru
      _
    // Predicated region
    $region10: #{tpu_custom_call.1} parent=1 // pred_check
      _
    $region11: #{tpu_custom_call.1} parent=1 // pred_check_branch
      %20 = sbr.rel (0) target = $region13
    $region12: #{tpu_custom_call.1} parent=1 // pred_region
      _
    $region13: #{tpu_custom_call.1} parent=1 // pred_fallthru
      _
    // Predicated region
    $region14: #{tpu_custom_call.1} parent=1 // pred_check
      _
    $region15: #{tpu_custom_call.1} parent=1 // pred_check_branch
      %22 = sbr.rel (0) target = $region17
    $region16: #{tpu_custom_call.1} parent=1 // pred_region
      _
    $region17: #{tpu_custom_call.1} parent=1 // pred_fallthru
      _
    // Predicated region
    $region18: #{tpu_custom_call.1} parent=1 // pred_check
      _
    $region19: #{tpu_custom_call.1} parent=1 // pred_check_branch
      %24 = sbr.rel (0) target = $region21
    $region20: #{tpu_custom_call.1} parent=1 // pred_region
      %s26 = ssub.s32 2048, 2048
      %27 = vsyncadd [#allocation3], %s26
      %s28 = sshll.u32 [#allocation2], 4
      %s29 = int_to_ptr.vmem [resolvable:$true] %s28
      %34 = dma.hbm_to_vmem [thread:$0]  %s4, 2048, %s29, [#allocation3], 128, 128, 8
    $region21: #{tpu_custom_call.1} parent=1 // pred_fallthru
      _
    // Predicated region
    $region22: #{tpu_custom_call.1} parent=1 // pred_check
      _
    $region23: #{tpu_custom_call.1} parent=1 // pred_check_branch
      %36 = sbr.rel (0) target = $region25
    $region24: #{tpu_custom_call.1} parent=1 // pred_region
      %37 = dma.done [#allocation3], 2048
    $region25: #{tpu_custom_call.1} parent=1 // pred_fallthru
      _
    %v39 = vld [vmem:[%s0] sm:$0xff]
    %v40 = vld [vmem:[%s1] sm:$0xff]
    %v41 = vld [vmem:[%s1 + $0x8] sm:$0xff]
    %v42 = vld [vmem:[%s1 + $0x10] sm:$0xff]
    %v43 = vld [vmem:[%s1 + $0x18] sm:$0xff]
    %v44 = vld [vmem:[%s1 + $0x20] sm:$0xff]
    %v45 = vld [vmem:[%s1 + $0x28] sm:$0xff]
    %v46 = vld [vmem:[%s1 + $0x30] sm:$0xff]
    %v47 = vld [vmem:[%s1 + $0x38] sm:$0xff]
    %v48 = vld [vmem:[%s1 + $0x40] sm:$0xff]
    %v49 = vld [vmem:[%s1 + $0x48] sm:$0xff]
    %v50 = vld [vmem:[%s1 + $0x50] sm:$0xff]
    %v51 = vld [vmem:[%s1 + $0x58] sm:$0xff]
    %v52 = vld [vmem:[%s1 + $0x60] sm:$0xff]
    %v53 = vld [vmem:[%s1 + $0x68] sm:$0xff]
    %v54 = vld [vmem:[%s1 + $0x70] sm:$0xff]
    %v55 = vld [vmem:[%s1 + $0x78] sm:$0xff]
    %v56 = vld [vmem:[%s2] sm:$0xff]
    %v57 = vld [vmem:[%s2 + $0x8] sm:$0xff]
    %v58 = vld [vmem:[%s2 + $0x10] sm:$0xff]
    %v59 = vld [vmem:[%s2 + $0x18] sm:$0xff]
    %v60 = vld [vmem:[%s2 + $0x20] sm:$0xff]
    %v61 = vld [vmem:[%s2 + $0x28] sm:$0xff]
    %v62 = vld [vmem:[%s2 + $0x30] sm:$0xff]
    %v63 = vld [vmem:[%s2 + $0x38] sm:$0xff]
    %v64 = vld [vmem:[%s2 + $0x40] sm:$0xff]
    %v65 = vld [vmem:[%s2 + $0x48] sm:$0xff]
    %v66 = vld [vmem:[%s2 + $0x50] sm:$0xff]
    %v67 = vld [vmem:[%s2 + $0x58] sm:$0xff]
    %v68 = vld [vmem:[%s2 + $0x60] sm:$0xff]
    %v69 = vld [vmem:[%s2 + $0x68] sm:$0xff]
    %v70 = vld [vmem:[%s2 + $0x70] sm:$0xff]
    %v71 = vld [vmem:[%s2 + $0x78] sm:$0xff]
    %v72 = vld [vmem:[%s3] sm:$0x1]
    %vm73 = vcmask 261120
    %v75 = vsel %vm73, %v39, 0
    %v78 = vsel %vm73, %v40, 0
    %v81 = vsel %vm73, %v41, 0
    %v84 = vsel %vm73, %v42, 0
    %v87 = vsel %vm73, %v43, 0
    %v90 = vsel %vm73, %v44, 0
    %v93 = vsel %vm73, %v45, 0
    %v96 = vsel %vm73, %v46, 0
    %v99 = vsel %vm73, %v47, 0
    %v102 = vsel %vm73, %v48, 0
    %v105 = vsel %vm73, %v49, 0
    %v108 = vsel %vm73, %v50, 0
    %v111 = vsel %vm73, %v51, 0
    %v114 = vsel %vm73, %v52, 0
    %v117 = vsel %vm73, %v53, 0
    %v120 = vsel %vm73, %v54, 0
    %v123 = vsel %vm73, %v55, 0
    %125 = vmatprep.subr.mxu0 0.0
    %126 = vmatpush1.xpose.msra.mxu0 %v123
    %127 = vmatprep.subr.mxu0 0.0
    %128 = vmatpush1.xpose.msra.mxu0 %v120
    %129 = vmatprep.subr.mxu0 0.0
    %130 = vmatpush1.xpose.msra.mxu0 %v117
    %131 = vmatprep.subr.mxu0 0.0
    %132 = vmatpush1.xpose.msra.mxu0 %v114
    %133 = vmatprep.subr.mxu0 0.0
    %134 = vmatpush1.xpose.msra.mxu0 %v111
    %135 = vmatprep.subr.mxu0 0.0
    %136 = vmatpush1.xpose.msra.mxu0 %v108
    %137 = vmatprep.subr.mxu0 0.0
    %138 = vmatpush1.xpose.msra.mxu0 %v105
    %139 = vmatprep.subr.mxu0 0.0
    %140 = vmatpush1.xpose.msra.mxu0 %v102
    %141 = vmatprep.subr.mxu0 0.0
    %142 = vmatpush1.xpose.msra.mxu0 %v99
    %143 = vmatprep.subr.mxu0 0.0
    %144 = vmatpush1.xpose.msra.mxu0 %v96
    %145 = vmatprep.subr.mxu0 0.0
    %146 = vmatpush1.xpose.msra.mxu0 %v93
    %147 = vmatprep.subr.mxu0 0.0
    %148 = vmatpush1.xpose.msra.mxu0 %v90
    %149 = vmatprep.subr.mxu0 0.0
    %150 = vmatpush1.xpose.msra.mxu0 %v87
    %151 = vmatprep.subr.mxu0 0.0
    %152 = vmatpush1.xpose.msra.mxu0 %v84
    %153 = vmatprep.subr.mxu0 0.0
    %154 = vmatpush1.xpose.msra.mxu0 %v81
    %155 = vmatprep.subr.mxu0 0.0
    %156 = vmatpush1.xpose.msra.mxu0 %v78
    %157 = vmatprep.subr.mxu0 0.0
    %158 = vmatpush2.xpose.msra.mxu0 0.0
    %159 = vmatprep.subr.mxu0 0.0
    %160 = vmatpush2.xpose.msra.mxu0 0.0
    %161 = vmatprep.subr.mxu0 0.0
    %162 = vmatpush2.xpose.msra.mxu0 0.0
    %163 = vmatprep.subr.mxu0 0.0
    %164 = vmatpush2.xpose.msra.mxu0 0.0
    %165 = vmatprep.subr.mxu0 0.0
    %166 = vmatpush2.xpose.msra.mxu0 0.0
    %167 = vmatprep.subr.mxu0 0.0
    %168 = vmatpush2.xpose.msra.mxu0 0.0
    %169 = vmatprep.subr.mxu0 0.0
    %170 = vmatpush2.xpose.msra.mxu0 0.0
    %171 = vmatprep.subr.mxu0 0.0
    %172 = vmatpush2.xpose.msra.mxu0 0.0
    %173 = vmatprep.subr.mxu0 0.0
    %174 = vmatpush2.xpose.msra.mxu0 0.0
    %175 = vmatprep.subr.mxu0 0.0
    %176 = vmatpush2.xpose.msra.mxu0 0.0
    %177 = vmatprep.subr.mxu0 0.0
    %178 = vmatpush2.xpose.msra.mxu0 0.0
    %179 = vmatprep.subr.mxu0 0.0
    %180 = vmatpush2.xpose.msra.mxu0 0.0
    %181 = vmatprep.subr.mxu0 0.0
    %182 = vmatpush2.xpose.msra.mxu0 0.0
    %183 = vmatprep.subr.mxu0 0.0
    %184 = vmatpush2.xpose.msra.mxu0 0.0
    %185 = vmatprep.subr.mxu0 0.0
    %186 = vmatpush2.xpose.msra.mxu0 0.0
    %187 = vmatprep.subr.mxu0 0.0
    %188 = vmatpush2.xpose.msra.mxu0 0.0
    %189 = vmatprep.mubr.f32.mxu0 0.0
    %190 = vmatmul.mubr.f32.gmra.mxu0 %v75
    %v191 = vpop.f32.mrf.mxu0
    %v192 = vadd.f32 0.0, %v191
    %v193 = vpop.f32.mrf.mxu0
    %194 = vdwg.mxu0
    %v195 = vlaneseq
    %v196 = vand.u32 %v195, 127
    %vm197 = vcmp.lt.s32.totalorder %v196, 16
    %v198 = vmul.f32 %v192, 2.0
    %v199 = vsel %vm197, %v198, -1e+30
    %200 = vmax.xlane.f32.xlu0 %v199
    %v201 = vpop.xlane.xlu0 %200
    %v202 = vsub.f32 %v199, %v201
    %v203 = vmul.f32 %v202, 1.442695
    %v204 = vpow.pop %v203
    %205 = vadd.xlane.f32.xlu0 %v204
    %v206 = vpop.xlane.xlu0 %205
    %v207 = vrcp.pop %v206
    %v208 = vmul.f32 %v204, %v207
    %209 = vmatprep.subr.mxu0 0.0
    %210 = vmatpush1.msra.mxu0 %v71
    %211 = vmatprep.subr.mxu0 0.0
    %212 = vmatpush1.msra.mxu0 %v70
    %213 = vmatprep.subr.mxu0 0.0
    %214 = vmatpush1.msra.mxu0 %v69
    %215 = vmatprep.subr.mxu0 0.0
    %216 = vmatpush1.msra.mxu0 %v68
    %217 = vmatprep.subr.mxu0 0.0
    %218 = vmatpush1.msra.mxu0 %v67
    %219 = vmatprep.subr.mxu0 0.0
    %220 = vmatpush1.msra.mxu0 %v66
    %221 = vmatprep.subr.mxu0 0.0
    %222 = vmatpush1.msra.mxu0 %v65
    %223 = vmatprep.subr.mxu0 0.0
    %224 = vmatpush1.msra.mxu0 %v64
    %225 = vmatprep.subr.mxu0 0.0
    %226 = vmatpush1.msra.mxu0 %v63
    %227 = vmatprep.subr.mxu0 0.0
    %228 = vmatpush1.msra.mxu0 %v62
    %229 = vmatprep.subr.mxu0 0.0
    %230 = vmatpush1.msra.mxu0 %v61
    %231 = vmatprep.subr.mxu0 0.0
    %232 = vmatpush1.msra.mxu0 %v60
    %233 = vmatprep.subr.mxu0 0.0
    %234 = vmatpush1.msra.mxu0 %v59
    %235 = vmatprep.subr.mxu0 0.0
    %236 = vmatpush1.msra.mxu0 %v58
    %237 = vmatprep.subr.mxu0 0.0
    %238 = vmatpush1.msra.mxu0 %v57
    %239 = vmatprep.subr.mxu0 0.0
    %240 = vmatpush1.msra.mxu0 %v56
    %241 = vmatprep.subr.mxu0 0.0
    %242 = vmatpush2.msra.mxu0 0.0
    %243 = vmatprep.subr.mxu0 0.0
    %244 = vmatpush2.msra.mxu0 0.0
    %245 = vmatprep.subr.mxu0 0.0
    %246 = vmatpush2.msra.mxu0 0.0
    %247 = vmatprep.subr.mxu0 0.0
    %248 = vmatpush2.msra.mxu0 0.0
    %249 = vmatprep.subr.mxu0 0.0
    %250 = vmatpush2.msra.mxu0 0.0
    %251 = vmatprep.subr.mxu0 0.0
    %252 = vmatpush2.msra.mxu0 0.0
    %253 = vmatprep.subr.mxu0 0.0
    %254 = vmatpush2.msra.mxu0 0.0
    %255 = vmatprep.subr.mxu0 0.0
    %256 = vmatpush2.msra.mxu0 0.0
    %257 = vmatprep.subr.mxu0 0.0
    %258 = vmatpush2.msra.mxu0 0.0
    %259 = vmatprep.subr.mxu0 0.0
    %260 = vmatpush2.msra.mxu0 0.0
    %261 = vmatprep.subr.mxu0 0.0
    %262 = vmatpush2.msra.mxu0 0.0
    %263 = vmatprep.subr.mxu0 0.0
    %264 = vmatpush2.msra.mxu0 0.0
    %265 = vmatprep.subr.mxu0 0.0
    %266 = vmatpush2.msra.mxu0 0.0
    %267 = vmatprep.subr.mxu0 0.0
    %268 = vmatpush2.msra.mxu0 0.0
    %269 = vmatprep.subr.mxu0 0.0
    %270 = vmatpush2.msra.mxu0 0.0
    %271 = vmatprep.subr.mxu0 0.0
    %272 = vmatpush2.msra.mxu0 0.0
    %273 = vmatprep.mubr.f32.mxu0 0.0
    %274 = vmatmul.mubr.f32.gmra.mxu0 %v208
    %v275 = vpop.f32.mrf.mxu0
    %v276 = vadd.f32 0.0, %v275
    %v277 = vpop.f32.mrf.mxu0
    %278 = vdwg.mxu0
    %v279 = vmul.f32 %v208, %v276
    %280 = vadd.xlane.f32.xlu0 %v279
    %v281 = vpop.xlane.xlu0 %280
    %v282 = vmul.f32 %v276, 2.0
    %v284 = vlaneseq
    %v285 = vshrl.u32 %v284, 7
    %v286 = vsub.s32 0, %v285
    %v287 = vrot.slane %v72, %v286
    %v289 = vsub.f32 %v287, %v282
    %v290 = vsel %vm197, %v289, 1e+30
    %291 = vmin.xlane.f32.xlu0 %v290
    %v292 = vpop.xlane.xlu0 %291
    %vm293 = vcmp.le.f32.partialorder %v290, %v292
    %v294 = vsel %vm293, %v196, 128
    %v295 = vand.u32 %v294, 65535
    %v296 = vshra.s32 %v294, 16
    %v297 = vcvt.s32.f32 %v295
    %v298 = vcvt.s32.f32 %v296
    %299 = vmin.xlane.f32.xlu0 %v298
    %v300 = vpop.xlane.xlu0 %299
    %vm301 = vcmp.eq.f32.partialorder %v298, %v300
    %v302 = vsel %vm301, %v297, inf
    %303 = vmin.xlane.f32.xlu0 %v302
    %v304 = vpop.xlane.xlu0 %303
    %v305 = vcvt.f32.s32 %v304
    %v306 = vcvt.f32.s32 %v300
    %v307 = vshll.u32 %v306, 16
    %v308 = vadd.s32 %v307, %v305
    %vm309 = vcmp.eq.s32.totalorder %v196, %v308
    %v310 = vsel %vm309, 1, 0
    %v311 = vcvt.s32.f32 %v310
    %v312 = vpack.c.bf16 %v311, %v311
    %v313 = vld [vmem:[#allocation2] sm:$0xff]
    %v314 = vld [vmem:[#allocation2 + $0x8] sm:$0xff]
    %v315 = vld [vmem:[#allocation2 + $0x10] sm:$0xff]
    %v316 = vld [vmem:[#allocation2 + $0x18] sm:$0xff]
    %v317 = vld [vmem:[#allocation2 + $0x20] sm:$0xff]
    %v318 = vld [vmem:[#allocation2 + $0x28] sm:$0xff]
    %v319 = vld [vmem:[#allocation2 + $0x30] sm:$0xff]
    %v320 = vld [vmem:[#allocation2 + $0x38] sm:$0xff]
    %v321 = vld [vmem:[#allocation2 + $0x40] sm:$0xff]
    %v322 = vld [vmem:[#allocation2 + $0x48] sm:$0xff]
    %v323 = vld [vmem:[#allocation2 + $0x50] sm:$0xff]
    %v324 = vld [vmem:[#allocation2 + $0x58] sm:$0xff]
    %v325 = vld [vmem:[#allocation2 + $0x60] sm:$0xff]
    %v326 = vld [vmem:[#allocation2 + $0x68] sm:$0xff]
    %v327 = vld [vmem:[#allocation2 + $0x70] sm:$0xff]
    %v328 = vld [vmem:[#allocation2 + $0x78] sm:$0xff]
    %v345 = vunpack.c.l.b16 %v313
    %v346 = vunpack.c.h.b16 %v313
    %v347 = vunpack.c.l.b16 %v314
    %v348 = vunpack.c.h.b16 %v314
    %v349 = vunpack.c.l.b16 %v315
    %v350 = vunpack.c.h.b16 %v315
    %v351 = vunpack.c.l.b16 %v316
    %v352 = vunpack.c.h.b16 %v316
    %v353 = vunpack.c.l.b16 %v317
    %v354 = vunpack.c.h.b16 %v317
    %v355 = vunpack.c.l.b16 %v318
    %v356 = vunpack.c.h.b16 %v318
    %v357 = vunpack.c.l.b16 %v319
    %v358 = vunpack.c.h.b16 %v319
    %v359 = vunpack.c.l.b16 %v320
    %v360 = vunpack.c.h.b16 %v320
    %v361 = vunpack.c.l.b16 %v321
    %v362 = vunpack.c.h.b16 %v321
    %v363 = vunpack.c.l.b16 %v322
    %v364 = vunpack.c.h.b16 %v322
    %v365 = vunpack.c.l.b16 %v323
    %v366 = vunpack.c.h.b16 %v323
    %v367 = vunpack.c.l.b16 %v324
    %v368 = vunpack.c.h.b16 %v324
    %v369 = vunpack.c.l.b16 %v325
    %v370 = vunpack.c.h.b16 %v325
    %v371 = vunpack.c.l.b16 %v326
    %v372 = vunpack.c.h.b16 %v326
    %v373 = vunpack.c.l.b16 %v327
    %v374 = vunpack.c.h.b16 %v327
    %v375 = vunpack.c.l.b16 %v328
    %v376 = vunpack.c.h.b16 %v328
    %v377 = vpack.c.b16 %v347, %v345
    %v378 = vpack.c.b16 %v348, %v346
    %v379 = vpack.c.b16 %v351, %v349
    %v380 = vpack.c.b16 %v352, %v350
    %v381 = vpack.c.b16 %v355, %v353
    %v382 = vpack.c.b16 %v356, %v354
    %v383 = vpack.c.b16 %v359, %v357
    %v384 = vpack.c.b16 %v360, %v358
    %v385 = vpack.c.b16 %v363, %v361
    %v386 = vpack.c.b16 %v364, %v362
    %v387 = vpack.c.b16 %v367, %v365
    %v388 = vpack.c.b16 %v368, %v366
    %v389 = vpack.c.b16 %v371, %v369
    %v390 = vpack.c.b16 %v372, %v370
    %v391 = vpack.c.b16 %v375, %v373
    %v392 = vpack.c.b16 %v376, %v374
    %409 = vmatprep.subr.bf16.mxu0 %v392
    %410 = vmatpush1.bf16.msra.mxu0 %v391
    %411 = vmatprep.subr.bf16.mxu0 %v390
    %412 = vmatpush1.bf16.msra.mxu0 %v389
    %413 = vmatprep.subr.bf16.mxu0 %v388
    %414 = vmatpush1.bf16.msra.mxu0 %v387
    %415 = vmatprep.subr.bf16.mxu0 %v386
    %416 = vmatpush1.bf16.msra.mxu0 %v385
    %417 = vmatprep.subr.bf16.mxu0 %v384
    %418 = vmatpush1.bf16.msra.mxu0 %v383
    %419 = vmatprep.subr.bf16.mxu0 %v382
    %420 = vmatpush1.bf16.msra.mxu0 %v381
    %421 = vmatprep.subr.bf16.mxu0 %v380
    %422 = vmatpush1.bf16.msra.mxu0 %v379
    %423 = vmatprep.subr.bf16.mxu0 %v378
    %424 = vmatpush1.bf16.msra.mxu0 %v377
    %425 = vmatprep.subr.bf16.mxu0 0
    %426 = vmatpush2.bf16.msra.mxu0 0
    %427 = vmatprep.subr.bf16.mxu0 0
    %428 = vmatpush2.bf16.msra.mxu0 0
    %429 = vmatprep.subr.bf16.mxu0 0
    %430 = vmatpush2.bf16.msra.mxu0 0
    %431 = vmatprep.subr.bf16.mxu0 0
    %432 = vmatpush2.bf16.msra.mxu0 0
    %433 = vmatprep.subr.bf16.mxu0 0
    %434 = vmatpush2.bf16.msra.mxu0 0
    %435 = vmatprep.subr.bf16.mxu0 0
    %436 = vmatpush2.bf16.msra.mxu0 0
    %437 = vmatprep.subr.bf16.mxu0 0
    %438 = vmatpush2.bf16.msra.mxu0 0
    %439 = vmatprep.subr.bf16.mxu0 0
    %440 = vmatpush2.bf16.msra.mxu0 0
    %441 = vmatprep.mubr.bf16.mxu0 0
    %442 = vmatmul.mubr.bf16.gmra.mxu0 %v312
    %v443 = vpop.f32.mrf.mxu0
    %v444 = vadd.f32 0.0, %v443
    %v445 = vpop.f32.mrf.mxu0
    %v446 = vadd.f32 0.0, %v445
    %v447 = vpop.f32.mrf.mxu0
    %v448 = vpop.f32.mrf.mxu0
    %449 = vdwg.mxu0
    %v450 = vpack.c.bf16 %v444, %v444
    %v451 = vpack.c.bf16 %v446, %v446
    %v454 = vunpack.c.l.b16 %v450
    %v455 = vunpack.c.l.b16 %v451
    %v456 = vpack.c.b16 %v455, %v454
    %458 = vst [vmem:[#allocation5] sm:$0xff] %v456
    %v459 = vadd.f32 %v292, %v281
    %v460 = vmax.f32 %v459, 0.0
    %v461 = vlaneseq
    %v462 = vshrl.u32 %v461, 7
    %s463 = smul.u32 0, 8
    %v464 = vstv %s463
    %v465 = vadd.s32 %v462, %v464
    %vm466 = vcmp.lt.s32.totalorder %v465, 8
    %v467 = vsel %vm466, %v460, 0.0
    %vm468 = vcmask 7168
    %v469 = vsel %vm468, %v467, 0.0
    %470 = vadd.xlane.f32.xlu0 %v469
    %v471 = vpop.xlane.xlu0 %470
    %v472 = vrot.slane %v471, 4
    %v473 = vadd.f32 %v471, %v472
    %v474 = vrot.slane %v473, 2
    %v475 = vadd.f32 %v473, %v474
    %v476 = vrot.slane %v475, 1
    %v477 = vadd.f32 %v475, %v476
    %s478 = vtos %v477
    %s479 = smul.f32 %s478, 0.00024414063
    %v480 = vstv %s479
    %vm481 = vcmask 0
    %482 = vst.msk [vmem:[#allocation6] sm:$0x1] %vm481, %v480
    // Predicated region
    $region26: #{tpu_custom_call.1} parent=1 // pred_check
      _
    $region27: #{tpu_custom_call.1} parent=1 // pred_check_branch
      %484 = sbr.rel (0) target = $region29
    $region28: #{tpu_custom_call.1} parent=1 // pred_region
      %s486 = ssub.s32 128, 128
      %487 = vsyncadd [#allocation4], %s486
      %s489 = sshll.u32 [#allocation5], 4
      %s490 = int_to_ptr.vmem [resolvable:$true] %s489
      %492 = dma.vmem_to_hbm [thread:$0]  %s490, 128, %s5, [#allocation4]
    $region29: #{tpu_custom_call.1} parent=1 // pred_fallthru
      _
    // Predicated region
    $region30: #{tpu_custom_call.1} parent=1 // pred_check
      _
    $region31: #{tpu_custom_call.1} parent=1 // pred_check_branch
      %494 = sbr.rel (0) target = $region33
    $region32: #{tpu_custom_call.1} parent=1 // pred_region
      %s496 = ssub.s32 16, 16
      %497 = vsyncadd [#allocation7], %s496
      %s499 = sshll.u32 [#allocation6], 4
      %s500 = int_to_ptr.vmem [resolvable:$true] %s499
      %502 = dma.vmem_to_hbm [thread:$0]  %s500, 16, %s6, [#allocation7]
    $region33: #{tpu_custom_call.1} parent=1 // pred_fallthru
      _
    // Predicated region
    $region34: #{tpu_custom_call.1} parent=1 // pred_check
      _
    $region35: #{tpu_custom_call.1} parent=1 // pred_check_branch
      %504 = sbr.rel (0) target = $region37
    $region36: #{tpu_custom_call.1} parent=1 // pred_region
      %505 = dma.done [#allocation4], 128
    $region37: #{tpu_custom_call.1} parent=1 // pred_fallthru
      _
    // Predicated region
    $region38: #{tpu_custom_call.1} parent=1 // pred_check
      _
    $region39: #{tpu_custom_call.1} parent=1 // pred_check_branch
      %507 = sbr.rel (0) target = $region41
    $region40: #{tpu_custom_call.1} parent=1 // pred_region
      %508 = dma.done [#allocation7], 16
    $region41: #{tpu_custom_call.1} parent=1 // pred_fallthru
      _
    %509 = vsyncpa [#allocation3], 1
    %510 = vsyncpa [#allocation4], 1
    %511 = vsyncpa [#allocation7], 1

</llo_original>
